<compile_context>
chip_gen: v5e
topology: v5e:2x2
jax: 0.10.0
libtpu: 0.0.40
codegen_flags: <defaults>
</compile_context>

<pallas_src>
import jax
import jax.numpy as jnp
from jax.experimental import pallas as pl
from jax.experimental.pallas import tpu as pltpu


def gate_kernel(x_ref, w1t_ref, b1_ref, w2t_ref, out_ref, acc_ref):
    li = pl.program_id(1)

    @pl.when(li == 0)
    def _():
        acc_ref[...] = jnp.zeros_like(acc_ref)

    # Native (tile_b, C, tile_l) block: C in sublanes, L in lanes.
    # Pooled-SUM over the streamed L tiles (cross-lane reduce -> XLU slot).
    acc_ref[...] += jnp.sum(x_ref[...].astype(jnp.float32), axis=-1)        # (tile_b, C)

    @pl.when(li == pl.num_programs(1) - 1)
    def _():
        c = acc_ref.shape[1]
        s = acc_ref[...]                                                     # (tile_b, C); 1/L folded into w1t
        # fc1 (+ folded BatchNorm) + ReLU, batched over the tile_b rows.
        z = jnp.dot(s, w1t_ref[...], preferred_element_type=jnp.float32) + b1_ref[...]
        z = jnp.maximum(z, 0.0)                                              # (tile_b, d)
        # fc2: single fused (d, 3C) matmul instead of three (d, C) ones.
        a = jnp.dot(z, w2t_ref[...], preferred_element_type=jnp.float32)    # (tile_b, 3C)
        a0 = a[:, 0 * c:1 * c]
        a1 = a[:, 1 * c:2 * c]
        a2 = a[:, 2 * c:3 * c]
        # softmax over the 3 gates (max-shifted)
        m = jnp.maximum(jnp.maximum(a0, a1), a2)
        e0 = jnp.exp(a0 - m)
        e1 = jnp.exp(a1 - m)
        e2 = jnp.exp(a2 - m)
        denom = e0 + e1 + e2
        inv = pl.reciprocal(denom, approx=True)      # EUP estimate (free slot)
        inv = inv * (2.0 - denom * inv)              # one Newton step -> ~f32-exact
        out_ref[:, 0 * c:1 * c] = e0 * inv
        out_ref[:, 1 * c:2 * c] = e1 * inv
        out_ref[:, 2 * c:3 * c] = e2 * inv


def gate_forward(x, w1, w2, gamma, beta, running_mean, running_var,
                 eps=1e-5, max_tile_l=2048, max_tile_b=8):
    """x: (B, C, L); w1: (d, C); w2: (3C, d); BN params: (d,). Returns [a0, a1, a2], each (B, C, 1)."""
    B, C, L = x.shape
    d = w1.shape[0]
    assert w2.shape == (3 * C, d)

    # ---- Fold BatchNorm (eval mode only) and the average-pool's 1/L into fc1. ----
    scale = (gamma.astype(jnp.float32) /
             jnp.sqrt(running_var.astype(jnp.float32) + eps))                # (d,)
    w1t = ((w1.astype(jnp.float32) * scale[:, None]) * (1.0 / L)).T          # (C, d)
    b1 = (beta.astype(jnp.float32) - running_mean.astype(jnp.float32) * scale).reshape(1, d)
    w2t = w2.astype(jnp.float32).T                                           # (d, 3C); column g*C + c

    itemsize = jnp.dtype(x.dtype).itemsize

    # ---- Batch tiling: take the whole batch if small, else blocks of max_tile_b (padded). ----
    tile_b = B if B <= max_tile_b else int(max_tile_b)
    num_b = pl.cdiv(B, tile_b)
    b_pad = num_b * tile_b

    # ---- L tiling: L lives in lanes -> tiles are multiples of 128; ~4 MiB per streamed block. ----
    budget_per_block = 4 * 1024 * 1024
    cap = max(128, (budget_per_block // max(1, tile_b * C * itemsize)) // 128 * 128)
    user_cap = (int(max_tile_l) // 128) * 128 if max_tile_l >= 128 else 128
    cap = max(128, min(cap, user_cap))
    if L <= cap:
        tile_l, num_l, l_pad = L, 1, L          # full-L block (last dim == full array dim)
    else:
        tile_l = cap
        num_l = pl.cdiv(L, tile_l)
        l_pad = num_l * tile_l

    if (b_pad, l_pad) != (B, L):
        # Zero-padding is exact: the kernel accumulates a SUM (true 1/L is folded into w1t)
        # and padded batch rows are sliced off afterwards.
        x = jnp.pad(x, ((0, b_pad - B), (0, 0), (0, l_pad - L)))

    grid = (num_b, num_l)   # B outer / "parallel", L inner / "arbitrary" (reduction last)

    # VMEM accounting: double-buffered x stream + double-buffered weights + output + accumulator.
    x_block_bytes = tile_b * C * tile_l * itemsize
    w_bytes = (C * d + d + d * 3 * C) * 4
    vmem_limit = int(min(48 * 1024 * 1024,
                         max(16 * 1024 * 1024,
                             2 * x_block_bytes + 2 * w_bytes
                             + 2 * tile_b * 3 * C * 4 + tile_b * C * 4 + (2 << 20))))

    cost = pl.CostEstimate(
        flops=int(B * L * C + 2 * B * C * d + 2 * B * d * 3 * C),
        transcendentals=int(4 * B * C),
        bytes_accessed=int(b_pad * l_pad * C * itemsize + w_bytes + b_pad * 3 * C * 4),
    )

    out = pl.pallas_call(
        gate_kernel,
        out_shape=jax.ShapeDtypeStruct((b_pad, 3 * C), jnp.float32),
        grid_spec=pltpu.PrefetchScalarGridSpec(
            num_scalar_prefetch=0,
            grid=grid,
            in_specs=[
                pl.BlockSpec((tile_b, C, tile_l), lambda b, l: (b, 0, l)),   # x, native (B,C,L) layout
                pl.BlockSpec((C, d), lambda b, l: (0, 0)),                   # folded fc1^T (invariant)
                pl.BlockSpec((1, d), lambda b, l: (0, 0)),                   # folded fc1 bias (invariant)
                pl.BlockSpec((d, 3 * C), lambda b, l: (0, 0)),               # fused fc2^T (invariant)
            ],
            out_specs=pl.BlockSpec((tile_b, 3 * C), lambda b, l: (b, 0)),    # lane-dense gate row
            scratch_shapes=[pltpu.VMEM((tile_b, C), jnp.float32)],           # pooled-sum accumulator
        ),
        compiler_params=pltpu.CompilerParams(
            dimension_semantics=("parallel", "arbitrary"),
            vmem_limit_bytes=vmem_limit,
        ),
        cost_estimate=cost,
    )(x, w1t, b1, w2t)

    # Wrapper glue: drop batch padding, split into the 3 gates, reshape to (B, C, 1).
    out = out[:B].reshape(B, 3, C)
    return [out[:, g, :].reshape(B, C, 1) for g in range(3)]


def _reference(x, w1, w2, gamma, beta, running_mean, running_var, eps=1e-5):
    # Pure-JAX reference mirroring the PyTorch forward (BN in eval mode).
    B, C, L = x.shape
    s = jnp.mean(x.astype(jnp.float32), axis=-1)               # (B, C)
    z = s @ w1.T                                               # (B, d)
    z = (z - running_mean) / jnp.sqrt(running_var + eps) * gamma + beta
    z = jnp.maximum(z, 0.0)
    a = (z @ w2.T).reshape(B, 3, C)                            # (B, 3, C)
    a = jax.nn.softmax(a, axis=1)
    return [a[:, i, :].reshape(B, C, 1) for i in range(3)]


if __name__ == "__main__":
    # Small, deterministic config: channels=64 -> d = max(64//2, 32) = 32,
    # bottleneck (= this module's input channel count) = 32, L = 200, B = 2.
    B, bottleneck, L = 2, 32, 200
    channels = 64
    d = max(channels // 2, 32)

    key = jax.random.PRNGKey(0)
    kx, kw1, kw2, kg, kb, km, kv = jax.random.split(key, 7)

    x = jax.random.normal(kx, (B, bottleneck, L), dtype=jnp.float32)
    w1 = jax.random.normal(kw1, (d, bottleneck), dtype=jnp.float32) * 0.1       # Conv1d(bottleneck->d, k=1)
    w2 = jax.random.normal(kw2, (3 * bottleneck, d), dtype=jnp.float32) * 0.1   # Conv1d(d->3*bottleneck, k=1)
    gamma = 1.0 + 0.1 * jax.random.normal(kg, (d,), dtype=jnp.float32)           # BN weight
    beta = 0.1 * jax.random.normal(kb, (d,), dtype=jnp.float32)                  # BN bias
    running_mean = 0.1 * jax.random.normal(km, (d,), dtype=jnp.float32)          # BN running_mean
    running_var = jnp.abs(1.0 + 0.1 * jax.random.normal(kv, (d,), dtype=jnp.float32))  # BN running_var

    # max_tile_l=128 exercises the streamed L reduction (2 tiles) and the zero-pad path (200 -> 256).
    outs = gate_forward(x, w1, w2, gamma, beta, running_mean, running_var, max_tile_l=128)
    outs = [jax.block_until_ready(o) for o in outs]

    refs = _reference(x, w1, w2, gamma, beta, running_mean, running_var)
    for o, r in zip(outs, refs):
        assert o.shape == (B, bottleneck, 1)
        assert jnp.allclose(o, r, atol=1e-4, rtol=1e-4), float(jnp.max(jnp.abs(o - r)))

    print("KERNEL_OK")
</pallas_src>

<mosaic_0001>
module attributes {stable_mosaic.version = 11 : i64} {
  func.func @gate_kernel(%arg0: i32, %arg1: i32, %arg2: memref<2x32x128xf32, #tpu.memory_space<vmem>>, %arg3: memref<32x32xf32, #tpu.memory_space<vmem>>, %arg4: memref<1x32xf32, #tpu.memory_space<vmem>>, %arg5: memref<32x96xf32, #tpu.memory_space<vmem>>, %arg6: memref<2x96xf32, #tpu.memory_space<vmem>>, %arg7: memref<2x32xf32, #tpu.memory_space<vmem>>) attributes {dimension_semantics = [#tpu.dimension_semantics<parallel>, #tpu.dimension_semantics<arbitrary>], iteration_bounds = array<i64: 1, 2>, scalar_prefetch = 0 : i64, scratch_operands = 1 : i64, tpu.core_type = #tpu.core_type<tc>, window_params = [{transform_indices = @transform_0, window_bounds = array<i64: 2, 32, 128>}, {pipeline_mode = #tpu.pipeline_mode<synchronous>, transform_indices = @transform_1, window_bounds = array<i64: 32, 32>}, {pipeline_mode = #tpu.pipeline_mode<synchronous>, transform_indices = @transform_2, window_bounds = array<i64: 1, 32>}, {pipeline_mode = #tpu.pipeline_mode<synchronous>, transform_indices = @transform_3, window_bounds = array<i64: 32, 96>}, {transform_indices = @transform_4, window_bounds = array<i64: 2, 96>}]} {
    %c0_i32 = arith.constant 0 : i32
    %0 = arith.cmpi eq, %arg1, %c0_i32 : i32
    %1 = arith.extui %0 : i1 to i32
    %c0_i32_0 = arith.constant 0 : i32
    %2 = arith.cmpi ne, %1, %c0_i32_0 : i32
    scf.if %2 {
      %cst_8 = arith.constant 0.000000e+00 : f32
      %11 = vector.broadcast %cst_8 : f32 to vector<2x32xf32>
      %c0_9 = arith.constant 0 : index
      %c0_10 = arith.constant 0 : index
      %12 = vector.load %arg7[%c0_9, %c0_10] : memref<2x32xf32, #tpu.memory_space<vmem>>, vector<2x32xf32>
      tpu.vector_store %arg7[%c0_9, %c0_10], %11 {strides = array<i32>} : memref<2x32xf32, #tpu.memory_space<vmem>>, vector<2x32xf32>,
    } else {
    }
    %c0 = arith.constant 0 : index
    %c0_1 = arith.constant 0 : index
    %3 = vector.load %arg7[%c0, %c0_1] : memref<2x32xf32, #tpu.memory_space<vmem>>, vector<2x32xf32>
    %c0_2 = arith.constant 0 : index
    %c0_3 = arith.constant 0 : index
    %c0_4 = arith.constant 0 : index
    %4 = vector.load %arg2[%c0_2, %c0_3, %c0_4] : memref<2x32x128xf32, #tpu.memory_space<vmem>>, vector<2x32x128xf32>
    %cst = arith.constant dense<0.000000e+00> : vector<2x32xf32>
    %5 = vector.multi_reduction <add>, %4, %cst [2] : vector<2x32x128xf32> to vector<2x32xf32>
    %6 = arith.addf %3, %5 : vector<2x32xf32>
    %c0_5 = arith.constant 0 : index
    %c0_6 = arith.constant 0 : index
    %7 = vector.load %arg7[%c0_5, %c0_6] : memref<2x32xf32, #tpu.memory_space<vmem>>, vector<2x32xf32>
    tpu.vector_store %arg7[%c0_5, %c0_6], %6 {strides = array<i32>} : memref<2x32xf32, #tpu.memory_space<vmem>>, vector<2x32xf32>,
    %c1_i32 = arith.constant 1 : i32
    %8 = arith.cmpi eq, %arg1, %c1_i32 : i32
    %9 = arith.extui %8 : i1 to i32
    %c0_i32_7 = arith.constant 0 : i32
    %10 = arith.cmpi ne, %9, %c0_i32_7 : i32
    scf.if %10 {
      %c0_8 = arith.constant 0 : index
      %c0_9 = arith.constant 0 : index
      %11 = vector.load %arg7[%c0_8, %c0_9] : memref<2x32xf32, #tpu.memory_space<vmem>>, vector<2x32xf32>
      %c0_10 = arith.constant 0 : index
      %c0_11 = arith.constant 0 : index
      %12 = vector.load %arg3[%c0_10, %c0_11] : memref<32x32xf32, #tpu.memory_space<vmem>>, vector<32x32xf32>
      %cst_12 = arith.constant dense<0.000000e+00> : vector<2x32xf32>
      %13 = tpu.matmul %11, %12, %cst_12 {dimension_numbers = #tpu.dot_dimension_numbers<[1], [0], [0], [1], [0, 0, 1, 1], [], []>} : vector<2x32xf32>, vector<32x32xf32>, vector<2x32xf32> -> vector<2x32xf32>
      %c0_13 = arith.constant 0 : index
      %c0_14 = arith.constant 0 : index
      %14 = vector.load %arg4[%c0_13, %c0_14] : memref<1x32xf32, #tpu.memory_space<vmem>>, vector<1x32xf32>
      %15 = vector.broadcast %14 : vector<1x32xf32> to vector<2x32xf32>
      %16 = arith.addf %13, %15 : vector<2x32xf32>
      %cst_15 = arith.constant 0.000000e+00 : f32
      %17 = vector.broadcast %cst_15 : f32 to vector<2x32xf32>
      %18 = arith.maximumf %16, %17 : vector<2x32xf32>
      %c0_16 = arith.constant 0 : index
      %c0_17 = arith.constant 0 : index
      %19 = vector.load %arg5[%c0_16, %c0_17] : memref<32x96xf32, #tpu.memory_space<vmem>>, vector<32x96xf32>
      %cst_18 = arith.constant dense<0.000000e+00> : vector<2x96xf32>
      %20 = tpu.matmul %18, %19, %cst_18 {dimension_numbers = #tpu.dot_dimension_numbers<[1], [0], [0], [1], [0, 0, 1, 1], [], []>} : vector<2x32xf32>, vector<32x96xf32>, vector<2x96xf32> -> vector<2x96xf32>
      %21 = vector.extract_strided_slice %20 {offsets = [0, 0], sizes = [2, 32], strides = [1, 1]} : vector<2x96xf32> to vector<2x32xf32>
      %22 = vector.extract_strided_slice %20 {offsets = [0, 32], sizes = [2, 32], strides = [1, 1]} : vector<2x96xf32> to vector<2x32xf32>
      %23 = vector.extract_strided_slice %20 {offsets = [0, 64], sizes = [2, 32], strides = [1, 1]} : vector<2x96xf32> to vector<2x32xf32>
      %24 = arith.maximumf %21, %22 : vector<2x32xf32>
      %25 = arith.maximumf %24, %23 : vector<2x32xf32>
      %26 = arith.subf %21, %25 : vector<2x32xf32>
      %27 = math.exp %26 : vector<2x32xf32>
      %28 = arith.subf %22, %25 : vector<2x32xf32>
      %29 = math.exp %28 : vector<2x32xf32>
      %30 = arith.subf %23, %25 : vector<2x32xf32>
      %31 = math.exp %30 : vector<2x32xf32>
      %32 = arith.addf %27, %29 : vector<2x32xf32>
      %33 = arith.addf %32, %31 : vector<2x32xf32>
      %34 = tpu.reciprocal %33 {approx = true} : vector<2x32xf32> -> vector<2x32xf32>
      %35 = arith.mulf %33, %34 : vector<2x32xf32>
      %cst_19 = arith.constant 2.000000e+00 : f32
      %36 = vector.broadcast %cst_19 : f32 to vector<2x32xf32>
      %37 = arith.subf %36, %35 : vector<2x32xf32>
      %38 = arith.mulf %34, %37 : vector<2x32xf32>
      %39 = arith.mulf %27, %38 : vector<2x32xf32>
      %c0_20 = arith.constant 0 : index
      %c0_21 = arith.constant 0 : index
      %40 = vector.load %arg6[%c0_20, %c0_21] : memref<2x96xf32, #tpu.memory_space<vmem>>, vector<2x32xf32>
      tpu.vector_store %arg6[%c0_20, %c0_21], %39 {strides = array<i32>} : memref<2x96xf32, #tpu.memory_space<vmem>>, vector<2x32xf32>,
      %41 = arith.mulf %29, %38 : vector<2x32xf32>
      %c0_22 = arith.constant 0 : index
      %c32 = arith.constant 32 : index
      %42 = vector.load %arg6[%c0_22, %c32] : memref<2x96xf32, #tpu.memory_space<vmem>>, vector<2x32xf32>
      tpu.vector_store %arg6[%c0_22, %c32], %41 {strides = array<i32>} : memref<2x96xf32, #tpu.memory_space<vmem>>, vector<2x32xf32>,
      %43 = arith.mulf %31, %38 : vector<2x32xf32>
      %c0_23 = arith.constant 0 : index
      %c64 = arith.constant 64 : index
      %44 = vector.load %arg6[%c0_23, %c64] : memref<2x96xf32, #tpu.memory_space<vmem>>, vector<2x32xf32>
      tpu.vector_store %arg6[%c0_23, %c64], %43 {strides = array<i32>} : memref<2x96xf32, #tpu.memory_space<vmem>>, vector<2x32xf32>,
    } else {
    }
    return
  }
  func.func @transform_0(%arg0: i32, %arg1: i32) -> (i32, i32, i32) {
    %c0_i32 = arith.constant 0 : i32
    %c0_i32_0 = arith.constant 0 : i32
    return %arg0, %c0_i32, %arg1 : i32, i32, i32
  }
  func.func @transform_1(%arg0: i32, %arg1: i32) -> (i32, i32) {
    %c0_i32 = arith.constant 0 : i32
    %c0_i32_0 = arith.constant 0 : i32
    %c0_i32_1 = arith.constant 0 : i32
    return %c0_i32, %c0_i32_0 : i32, i32
  }
  func.func @transform_2(%arg0: i32, %arg1: i32) -> (i32, i32) {
    %c0_i32 = arith.constant 0 : i32
    %c0_i32_0 = arith.constant 0 : i32
    %c0_i32_1 = arith.constant 0 : i32
    return %c0_i32, %c0_i32_0 : i32, i32
  }
  func.func @transform_3(%arg0: i32, %arg1: i32) -> (i32, i32) {
    %c0_i32 = arith.constant 0 : i32
    %c0_i32_0 = arith.constant 0 : i32
    %c0_i32_1 = arith.constant 0 : i32
    return %c0_i32, %c0_i32_0 : i32, i32
  }
  func.func @transform_4(%arg0: i32, %arg1: i32) -> (i32, i32) {
    %c0_i32 = arith.constant 0 : i32
    %c0_i32_0 = arith.constant 0 : i32
    return %arg0, %c0_i32 : i32, i32
  }
}

</mosaic_0001>

<llo_original>
// kernel: tpu_custom_call.1
$region0: #{tpu_custom_call.1}
  #allocation0 [shape = 'u32[]', space=smem, size = 0x4, offset = 0x4, fixed_abs, tag = 'smem constant byte address 0x4 - core index']
  #allocation1 [shape = 'u32[72,128]{1,0:T(1,128)}', space=vmem, size = 0x9000, scoped, tag = 'internal scratch']
  #allocation2 [shape = 'f32[2,32]{1,0:T(2,128)}', space=vmem, size = 0x400, scoped, tag = 'scratch operand']
  %s0 = inlined_call_operand.hbm [shape: f32[2,32,256], index: 0, kind: input, shape index: {}]
  %s1 = inlined_call_operand.hbm [shape: f32[32,32], index: 1, kind: input, shape index: {}]
  %s2 = inlined_call_operand.vmem [shape: f32[1,32], index: 2, kind: input, shape index: {}]
  %s3 = inlined_call_operand.hbm [shape: f32[32,96], index: 3, kind: input, shape index: {}]
  %s4 = inlined_call_operand.hbm [shape: f32[2,96], index: 4, kind: output, shape index: {}]
  %s5 = sld [smem:[#allocation0]]
  $region69: #{tpu_custom_call.1} parent=0
    _
  %s7 = ssub.s32 1, %s5
  %s8 = scalar_select 0, %s7, %s5
  $region1: #{tpu_custom_call.1} parent=0
    #allocation3 [shape = 'u8[65536]{0}', space=vmem, size = 0x10000, scoped, tag = 'input window, operand 0']
    #allocation4 [shape = 's32[2]{0}', space=sflag, size = 0x8, scoped, tag = 'scoped memory for tpu_custom_call.1']
    #allocation5 [shape = 's32[2]{0}', space=sflag, size = 0x8, scoped, tag = 'scoped memory for tpu_custom_call.1']
    #allocation6 [shape = 'u8[16384]{0}', space=vmem, size = 0x4000, scoped, tag = 'input window, operand 1, single buffered']
    #allocation7 [shape = 's32[1]{0}', space=sflag, size = 0x4, scoped, tag = 'scoped memory for tpu_custom_call.1']
    #allocation8 [shape = 'u8[16384]{0}', space=vmem, size = 0x4000, scoped, tag = 'input window, operand 3, single buffered']
    #allocation9 [shape = 'u8[1024]{0}', space=vmem, size = 0x400, scoped, tag = 'output window, operand 0, single buffered']
    %9 = vsyncpa [#allocation4], 0
    %s10 = scalar_lea.sflag [#allocation4], 1
    %11 = vsyncpa %s10, 0
    %12 = vsyncpa [#allocation7], 0
    %13 = vsyncpa [#allocation5], 0
    loop: start=0, step=1, limit=4
    $region2: #{tpu_custom_call.1} parent=1 // loop_pre_header
      _
    $region3: #{tpu_custom_call.1} parent=1 // loop_header
      %s15 = sphi 0, %s19
      %p16 = scmp.ge.s32.totalorder %s15, 4
      %s22 = sphi 0, %s34
      %s23 = sphi 0, %s30
      %s24 = sphi 0, %s22
      %s25 = sphi 0, %s23
      %s26 = sphi 0, %s24
      %s27 = sphi 0, %s25
      %s39 = sphi 0, %s41
      %s42 = sphi 0, %s39
      %s43 = sphi 0, %s42
      %s59 = sphi 0, %s43
      %s63 = sphi 0, %s63
      %s65 = sphi 0, %s63
      %s66 = sphi 0, %s65
      %s80 = sphi 0, %s66
      %s84 = sphi 0, %s84
      %s86 = sphi 0, %s84
      %s87 = sphi 0, %s86
      %s101 = sphi 0, %s87
      %s105 = sphi 0, %s105
      %s107 = sphi 0, %s105
      %s108 = sphi 0, %s107
      %s122 = sphi 0, %s108
      %s128 = sphi 0, %s130
      %s131 = sphi 0, %s128
      %s132 = sphi 0, %s131
      %s148 = sphi 0, %s132
    $region4: #{tpu_custom_call.1} parent=1 // loop_header_branch
      %18 = sbr.rel (%p16) target = $region8
    $region5: #{tpu_custom_call.1} parent=1 // loop_body
      %s20 = ssub.s32 %s15, 1
      %s21 = ssub.s32 %s15, 2
      %s28 = sadd.s32 1, %s23
      %p29 = scmp.ge.s32.totalorder %s28, 2
      %s30 = scalar_select %p29, 0, %s28
      %s31 = sadd.s32 1, %s22
      %s32 = scalar_select %p29, %s31, %s22
      %p33 = scmp.ge.s32.totalorder %s32, 1
      %s34 = scalar_select %p33, 0, %s32
      %s35 = ssub.s32 %s22, %s34
      %s36 = ssub.s32 %s23, %s30
      %s37 = sor.u32 %s35, %s36
      %p38 = scmp.eq.s32.totalorder %s37, 0
      %s40 = sadd.s32 %s39, 1
      %s41 = scalar_select %p38, %s39, %s40
      %p44 = pneg %p38
      %p45 = scmp.eq.s32.totalorder %s15, 1
      %p46 = por %p44, %p45
      %p47 = scmp.ne.s32.totalorder %s39, %s42
      %p48 = scmp.eq.s32.totalorder %s15, 0
      %p49 = por %p47, %p48
      %p50 = scmp.ne.s32.totalorder %s39, %s42
      %p51 = scmp.eq.s32.totalorder %s20, 1
      %p52 = por %p50, %p51
      %p53 = scmp.ne.s32.totalorder %s42, %s43
      %p54 = scmp.eq.s32.totalorder %s20, 0
      %p55 = por %p53, %p54
      %p56 = scmp.ne.s32.totalorder %s42, %s43
      %p57 = scmp.eq.s32.totalorder %s21, 1
      %p58 = por %p56, %p57
      %p60 = scmp.ne.s32.totalorder %s43, %s59
      %p61 = scmp.eq.s32.totalorder %s21, 0
      %p62 = por %p60, %p61
      %s64 = sadd.s32 %s63, 1
      %p67 = scmp.eq.s32.totalorder %s15, 1
      %p68 = scmp.ne.s32.totalorder %s63, %s65
      %p69 = scmp.eq.s32.totalorder %s15, 0
      %p70 = por %p68, %p69
      %p71 = scmp.ne.s32.totalorder %s63, %s65
      %p72 = scmp.eq.s32.totalorder %s20, 1
      %p73 = por %p71, %p72
      %p74 = scmp.ne.s32.totalorder %s65, %s66
      %p75 = scmp.eq.s32.totalorder %s20, 0
      %p76 = por %p74, %p75
      %p77 = scmp.ne.s32.totalorder %s65, %s66
      %p78 = scmp.eq.s32.totalorder %s21, 1
      %p79 = por %p77, %p78
      %p81 = scmp.ne.s32.totalorder %s66, %s80
      %p82 = scmp.eq.s32.totalorder %s21, 0
      %p83 = por %p81, %p82
      %s85 = sadd.s32 %s84, 1
      %p88 = scmp.eq.s32.totalorder %s15, 1
      %p89 = scmp.ne.s32.totalorder %s84, %s86
      %p90 = scmp.eq.s32.totalorder %s15, 0
      %p91 = por %p89, %p90
      %p92 = scmp.ne.s32.totalorder %s84, %s86
      %p93 = scmp.eq.s32.totalorder %s20, 1
      %p94 = por %p92, %p93
      %p95 = scmp.ne.s32.totalorder %s86, %s87
      %p96 = scmp.eq.s32.totalorder %s20, 0
      %p97 = por %p95, %p96
      %p98 = scmp.ne.s32.totalorder %s86, %s87
      %p99 = scmp.eq.s32.totalorder %s21, 1
      %p100 = por %p98, %p99
      %p102 = scmp.ne.s32.totalorder %s87, %s101
      %p103 = scmp.eq.s32.totalorder %s21, 0
      %p104 = por %p102, %p103
      %s106 = sadd.s32 %s105, 1
      %p109 = scmp.eq.s32.totalorder %s15, 1
      %p110 = scmp.ne.s32.totalorder %s105, %s107
      %p111 = scmp.eq.s32.totalorder %s15, 0
      %p112 = por %p110, %p111
      %p113 = scmp.ne.s32.totalorder %s105, %s107
      %p114 = scmp.eq.s32.totalorder %s20, 1
      %p115 = por %p113, %p114
      %p116 = scmp.ne.s32.totalorder %s107, %s108
      %p117 = scmp.eq.s32.totalorder %s20, 0
      %p118 = por %p116, %p117
      %p119 = scmp.ne.s32.totalorder %s107, %s108
      %p120 = scmp.eq.s32.totalorder %s21, 1
      %p121 = por %p119, %p120
      %p123 = scmp.ne.s32.totalorder %s108, %s122
      %p124 = scmp.eq.s32.totalorder %s21, 0
      %p125 = por %p123, %p124
      %s126 = ssub.s32 %s22, %s34
      %p127 = scmp.eq.s32.totalorder %s126, 0
      %s129 = sadd.s32 %s128, 1
      %s130 = scalar_select %p127, %s128, %s129
      %p133 = pneg %p127
      %p134 = scmp.eq.s32.totalorder %s15, 1
      %p135 = por %p133, %p134
      %p136 = scmp.ne.s32.totalorder %s128, %s131
      %p137 = scmp.eq.s32.totalorder %s15, 0
      %p138 = por %p136, %p137
      %p139 = scmp.ne.s32.totalorder %s128, %s131
      %p140 = scmp.eq.s32.totalorder %s20, 1
      %p141 = por %p139, %p140
      %p142 = scmp.ne.s32.totalorder %s131, %s132
      %p143 = scmp.eq.s32.totalorder %s20, 0
      %p144 = por %p142, %p143
      %p145 = scmp.ne.s32.totalorder %s131, %s132
      %p146 = scmp.eq.s32.totalorder %s21, 1
      %p147 = por %p145, %p146
      %p149 = scmp.ne.s32.totalorder %s132, %s148
      %p150 = scmp.eq.s32.totalorder %s21, 0
      %p151 = por %p149, %p150
      %p152 = scmp.le.s32.totalorder 1, %s15
      %p153 = scmp.lt.s32.totalorder %s15, 3
      %p154 = pnand %p152, %p153
      %p155 = pneg %p154
      // Predicated region
      $region9: #{tpu_custom_call.1} parent=5 // pred_check
        _
      $region10: #{tpu_custom_call.1} parent=5 // pred_check_branch
        %157 = sbr.rel (%p154) target = $region12
      $region11: #{tpu_custom_call.1} parent=5 // pred_region
        %s158 = ssub.s32 %s15, 1
        // Predicated region
        $region13: #{tpu_custom_call.1} parent=11 // pred_check
          %p159 = pneg %p76
        $region14: #{tpu_custom_call.1} parent=11 // pred_check_branch
          %161 = sbr.rel (%p159) target = $region16
        $region15: #{tpu_custom_call.1} parent=11 // pred_region
          %163 = vsyncadd [#allocation7], 0
          %s164 = sshll.u32 %s1, 4
          %s165 = int_to_ptr.hbm [resolvable:$true] %s164
          %s166 = sshll.u32 [#allocation6], 4
          %s167 = int_to_ptr.vmem [resolvable:$true] %s166
          %172 = dma.hbm_to_vmem [thread:$0]  %s165, 512, %s167, [#allocation7], 128, 128, 8
        $region16: #{tpu_custom_call.1} parent=11 // pred_fallthru
          _
        // Predicated region
        $region17: #{tpu_custom_call.1} parent=11 // pred_check
          %p173 = pneg %p97
        $region18: #{tpu_custom_call.1} parent=11 // pred_check_branch
          %175 = sbr.rel (%p173) target = $region20
        $region19: #{tpu_custom_call.1} parent=11 // pred_region
          _
        $region20: #{tpu_custom_call.1} parent=11 // pred_fallthru
          _
        // Predicated region
        $region21: #{tpu_custom_call.1} parent=11 // pred_check
          %p176 = pneg %p118
        $region22: #{tpu_custom_call.1} parent=11 // pred_check_branch
          %178 = sbr.rel (%p176) target = $region24
        $region23: #{tpu_custom_call.1} parent=11 // pred_region
          %180 = vsyncadd [#allocation7], 0
          %s181 = sshll.u32 %s3, 4
          %s182 = int_to_ptr.hbm [resolvable:$true] %s181
          %s183 = sshll.u32 [#allocation8], 4
          %s184 = int_to_ptr.vmem [resolvable:$true] %s183
          %189 = dma.hbm_to_vmem [thread:$0]  %s182, 512, %s184, [#allocation7], 128, 128, 8
        $region24: #{tpu_custom_call.1} parent=11 // pred_fallthru
          _
      $region12: #{tpu_custom_call.1} parent=5 // pred_fallthru
        _
      %p190 = scmp.lt.s32.totalorder %s15, 2
      // Predicated region
      $region25: #{tpu_custom_call.1} parent=5 // pred_check
        %p191 = pneg %p190
      $region26: #{tpu_custom_call.1} parent=5 // pred_check_branch
        %193 = sbr.rel (%p191) target = $region28
      $region27: #{tpu_custom_call.1} parent=5 // pred_region
        // Predicated region
        $region29: #{tpu_custom_call.1} parent=27 // pred_check
          %p194 = pneg %p49
        $region30: #{tpu_custom_call.1} parent=27 // pred_check_branch
          %196 = sbr.rel (%p194) target = $region32
        $region31: #{tpu_custom_call.1} parent=27 // pred_region
          %s197 = sand.u32 %s39, 1
          %s198 = scalar_lea.sflag [#allocation4], %s197
          %s199 = sand.u32 %s39, 1
          %s200 = smul.addr %s199, 64
          %s201 = scalar_lea.vmem [#allocation3], %s200
          %s202 = smul.u32 2, %s22
          %204 = vsyncadd %s198, 0
          %s205 = smul.addr %s202, 8
          %s206 = sadd.s32 %s23, %s205
          %s207 = smul.addr %s206, 8
          %s208 = scalar_lea.hbm %s0, %s207
          %s209 = sshll.u32 %s208, 4
          %s210 = int_to_ptr.hbm [resolvable:$true] %s209
          %s211 = sshll.u32 %s201, 4
          %s212 = int_to_ptr.vmem [resolvable:$true] %s211
          %217 = dma.hbm_to_vmem [thread:$0]  %s210, 1024, %s212, %s198, 256, 128, 8
        $region32: #{tpu_custom_call.1} parent=27 // pred_fallthru
          _
      $region28: #{tpu_custom_call.1} parent=5 // pred_fallthru
        _
      %p218 = scmp.le.s32.totalorder 1, %s15
      %p219 = scmp.lt.s32.totalorder %s15, 3
      %p220 = pnand %p218, %p219
      %p221 = pneg %p220
      // Predicated region
      $region33: #{tpu_custom_call.1} parent=5 // pred_check
        _
      $region34: #{tpu_custom_call.1} parent=5 // pred_check_branch
        %223 = sbr.rel (%p220) target = $region36
      $region35: #{tpu_custom_call.1} parent=5 // pred_region
        %s224 = ssub.s32 %s15, 1
        %s225 = sand.u32 %s42, 1
        %s226 = scalar_lea.sflag [#allocation4], %s225
        %s227 = sand.u32 %s42, 1
        %s228 = smul.addr %s227, 64
        %s229 = scalar_lea.vmem [#allocation3], %s228
        // Predicated region
        $region37: #{tpu_custom_call.1} parent=35 // pred_check
          %p230 = pneg %p55
        $region38: #{tpu_custom_call.1} parent=35 // pred_check_branch
          %232 = sbr.rel (%p230) target = $region40
        $region39: #{tpu_custom_call.1} parent=35 // pred_region
          %234 = dma.done %s226, 1024
        $region40: #{tpu_custom_call.1} parent=35 // pred_fallthru
          _
        // Predicated region
        $region41: #{tpu_custom_call.1} parent=35 // pred_check
          %p235 = pneg %p76
        $region42: #{tpu_custom_call.1} parent=35 // pred_check_branch
          %237 = sbr.rel (%p235) target = $region44
        $region43: #{tpu_custom_call.1} parent=35 // pred_region
          %239 = dma.done [#allocation7], 512
        $region44: #{tpu_custom_call.1} parent=35 // pred_fallthru
          _
        // Predicated region
        $region45: #{tpu_custom_call.1} parent=35 // pred_check
          %p240 = pneg %p118
        $region46: #{tpu_custom_call.1} parent=35 // pred_check_branch
          %242 = sbr.rel (%p240) target = $region48
        $region47: #{tpu_custom_call.1} parent=35 // pred_region
          %244 = dma.done [#allocation7], 512
        $region48: #{tpu_custom_call.1} parent=35 // pred_fallthru
          _
        %s245 = sand.u32 %s42, 1
        %s246 = scalar_lea.sflag [#allocation4], %s245
        %s247 = sand.u32 %s42, 1
        %s248 = smul.addr %s247, 64
        %s249 = scalar_lea.vmem [#allocation3], %s248
        %p250 = pneg %p55
        %p251 = pneg %p52
        %p252 = pneg %p76
        %p253 = pneg %p73
        %p254 = pneg %p97
        %p255 = pneg %p94
        %p256 = pneg %p118
        %p257 = pneg %p115
        %p258 = pneg %p144
        %p259 = pneg %p141
        %s260 = smul.u32 2, %s24
        %p261 = scmp.eq.s32.totalorder %s25, 0
        // Predicated region
        $region49: #{tpu_custom_call.1} parent=35 // pred_check
          %p262 = pneg %p261
        $region50: #{tpu_custom_call.1} parent=35 // pred_check_branch
          %264 = sbr.rel (%p262) target = $region52
        $region51: #{tpu_custom_call.1} parent=35 // pred_region
          %vm265 = vcmask 254976
          %266 = vst.msk [vmem:[#allocation2] sm:$0x3] %vm265, 0.0
        $region52: #{tpu_custom_call.1} parent=35 // pred_fallthru
          _
        %v267 = vld [vmem:[#allocation2] sm:$0x3]
        %v268 = vld [vmem:[%s229] sm:$0xff]
        %v269 = vld [vmem:[%s229 + $0x8] sm:$0xff]
        %v270 = vld [vmem:[%s229 + $0x10] sm:$0xff]
        %v271 = vld [vmem:[%s229 + $0x18] sm:$0xff]
        %v272 = vld [vmem:[%s229 + $0x20] sm:$0xff]
        %v273 = vld [vmem:[%s229 + $0x28] sm:$0xff]
        %v274 = vld [vmem:[%s229 + $0x30] sm:$0xff]
        %v275 = vld [vmem:[%s229 + $0x38] sm:$0xff]
        %276 = vadd.xlane.f32.xlu0 %v268
        %v277 = vpop.xlane.xlu0 %276
        %278 = vadd.xlane.f32.xlu0 %v269
        %v279 = vpop.xlane.xlu0 %278
        %280 = vadd.xlane.f32.xlu0 %v270
        %v281 = vpop.xlane.xlu0 %280
        %282 = vadd.xlane.f32.xlu0 %v271
        %v283 = vpop.xlane.xlu0 %282
        %284 = vadd.xlane.f32.xlu0 %v272
        %v285 = vpop.xlane.xlu0 %284
        %286 = vadd.xlane.f32.xlu0 %v273
        %v287 = vpop.xlane.xlu0 %286
        %288 = vadd.xlane.f32.xlu0 %v274
        %v289 = vpop.xlane.xlu0 %288
        %290 = vadd.xlane.f32.xlu0 %v275
        %v291 = vpop.xlane.xlu0 %290
        %v300 = vlaneseq
        %v301 = vand.u32 %v300, 127
        %v302 = vperm.slane %v277, %v301
        %v303 = vadd.s32 %v301, 4294967288
        %v304 = vperm.slane %v279, %v303
        %vm305 = vcmask 130112
        %v306 = vsel %vm305, %v304, %v302
        %v307 = vadd.s32 %v301, 4294967280
        %v308 = vperm.slane %v281, %v307
        %vm309 = vcmask 195712
        %v310 = vsel %vm309, %v308, %v306
        %v311 = vadd.s32 %v301, 4294967272
        %v312 = vperm.slane %v283, %v311
        %vm313 = vcmask 261312
        %v314 = vsel %vm313, %v312, %v310
        %v315 = vperm.slane %v285, %v301
        %v316 = vperm.slane %v287, %v303
        %v317 = vsel %vm305, %v316, %v315
        %v318 = vperm.slane %v289, %v307
        %v319 = vsel %vm309, %v318, %v317
        %v320 = vperm.slane %v291, %v311
        %v321 = vsel %vm313, %v320, %v319
        %vm322 = vcmask 1041409
        %v323 = vsel %vm322, %v321, %v314
        %v325 = vadd.f32 %v267, %v323
        %vm326 = vcmask 254976
        %327 = vst.msk [vmem:[#allocation2] sm:$0x3] %vm326, %v325
        %p328 = scmp.eq.s32.totalorder %s25, 1
        // Predicated region
        $region53: #{tpu_custom_call.1} parent=35 // pred_check
          %p329 = pneg %p328
        $region54: #{tpu_custom_call.1} parent=35 // pred_check_branch
          %331 = sbr.rel (%p329) target = $region56
        $region55: #{tpu_custom_call.1} parent=35 // pred_region
          %v332 = vld [vmem:[#allocation2] sm:$0x3]
          %v333 = vld [vmem:[#allocation6] sm:$0xff]
          %v334 = vld [vmem:[#allocation6 + $0x8] sm:$0xff]
          %v335 = vld [vmem:[#allocation6 + $0x10] sm:$0xff]
          %v336 = vld [vmem:[#allocation6 + $0x18] sm:$0xff]
          %v337 = vld [vmem:[%s2] sm:$0x1]
          %v339 = vperm.slane %v337, 0
          %vm341 = vcmask 261120
          %v343 = vsel %vm341, %v332, 0
          %345 = vmatpush.msra.mxu0 0.0
          %346 = vmatpush.msra.mxu0 0.0
          %347 = vmatpush.msra.mxu0 0.0
          %348 = vmatpush.msra.mxu0 0.0
          %349 = vmatpush.msra.mxu0 0.0
          %350 = vmatpush.msra.mxu0 0.0
          %351 = vmatpush.msra.mxu0 0.0
          %352 = vmatpush.msra.mxu0 0.0
          %353 = vmatpush.msra.mxu0 0.0
          %354 = vmatpush.msra.mxu0 0.0
          %355 = vmatpush.msra.mxu0 0.0
          %356 = vmatpush.msra.mxu0 0.0
          %357 = vmatpush.msra.mxu0 %v336
          %358 = vmatpush.msra.mxu0 %v335
          %359 = vmatpush.msra.mxu0 %v334
          %360 = vmatpush.msra.mxu0 %v333
          %361 = vmatmul.f32.gmra.mxu0 %v343
          %v362 = vpop.f32.mrf.mxu0
          %v363 = vadd.f32 %v339, %v362
          %364 = vdwg.mxu0
          %v365 = vmax.f32 %v363, 0.0
          %v366 = vld [vmem:[#allocation8] sm:$0xff]
          %v367 = vld [vmem:[#allocation8 + $0x8] sm:$0xff]
          %v368 = vld [vmem:[#allocation8 + $0x10] sm:$0xff]
          %v369 = vld [vmem:[#allocation8 + $0x18] sm:$0xff]
          %v371 = vsel %vm341, %v365, 0
          %373 = vmatpush.msra.mxu0 0.0
          %374 = vmatpush.msra.mxu0 0.0
          %375 = vmatpush.msra.mxu0 0.0
          %376 = vmatpush.msra.mxu0 0.0
          %377 = vmatpush.msra.mxu0 0.0
          %378 = vmatpush.msra.mxu0 0.0
          %379 = vmatpush.msra.mxu0 0.0
          %380 = vmatpush.msra.mxu0 0.0
          %381 = vmatpush.msra.mxu0 0.0
          %382 = vmatpush.msra.mxu0 0.0
          %383 = vmatpush.msra.mxu0 0.0
          %384 = vmatpush.msra.mxu0 0.0
          %385 = vmatpush.msra.mxu0 %v369
          %386 = vmatpush.msra.mxu0 %v368
          %387 = vmatpush.msra.mxu0 %v367
          %388 = vmatpush.msra.mxu0 %v366
          %389 = vmatmul.f32.gmra.mxu0 %v371
          %v390 = vpop.f32.mrf.mxu0
          %v391 = vadd.f32 0.0, %v390
          %392 = vdwg.mxu0
          %394 = vrot.lane.b32.xlu0 %v391, 96
          %v395 = vpop.permute.xlu0 %394
          %v397 = vmax.f32 %v391, %v395
          %398 = vrot.lane.b32.xlu0 %v391, 64
          %v399 = vpop.permute.xlu0 %398
          %v401 = vmax.f32 %v397, %v399
          %v402 = vsub.f32 %v391, %v401
          %v403 = vmul.f32 %v402, 1.442695
          %v404 = vpow.pop %v403
          %406 = vrot.lane.b32.xlu0 %v401, 32
          %v407 = vpop.permute.xlu0 %406
          %v409 = vsub.f32 %v391, %v407
          %v410 = vmul.f32 %v409, 1.442695
          %v411 = vpow.pop %v410
          %412 = vrot.lane.b32.xlu0 %v401, 64
          %v413 = vpop.permute.xlu0 %412
          %v415 = vsub.f32 %v391, %v413
          %v416 = vmul.f32 %v415, 1.442695
          %v417 = vpow.pop %v416
          %419 = vrot.lane.b32.xlu0 %v411, 96
          %v420 = vpop.permute.xlu0 %419
          %v422 = vadd.f32 %v404, %v420
          %424 = vrot.lane.b32.xlu0 %v417, 64
          %v425 = vpop.permute.xlu0 %424
          %v427 = vadd.f32 %v422, %v425
          %v428 = vrcp.pop %v427
          %v429 = vmul.f32 %v427, %v428
          %v430 = vsub.f32 2.0, %v429
          %v431 = vmul.f32 %v428, %v430
          %v432 = vmul.f32 %v404, %v431
          %433 = vst.msk [vmem:[#allocation9] sm:$0x3] %vm326, %v432
          %435 = vrot.lane.b32.xlu0 %v431, 32
          %v436 = vpop.permute.xlu0 %435
          %v438 = vmul.f32 %v411, %v436
          %vm439 = vcmask 517376
          %440 = vst.msk [vmem:[#allocation9] sm:$0x3] %vm439, %v438
          %441 = vrot.lane.b32.xlu0 %v431, 64
          %v442 = vpop.permute.xlu0 %441
          %v444 = vmul.f32 %v417, %v442
          %vm445 = vcmask 779776
          %446 = vst.msk [vmem:[#allocation9] sm:$0x3] %vm445, %v444
        $region56: #{tpu_custom_call.1} parent=35 // pred_fallthru
          _
        // Predicated region
        $region57: #{tpu_custom_call.1} parent=35 // pred_check
          %p447 = pneg %p141
        $region58: #{tpu_custom_call.1} parent=35 // pred_check_branch
          %449 = sbr.rel (%p447) target = $region60
        $region59: #{tpu_custom_call.1} parent=35 // pred_region
          %451 = vsyncadd [#allocation5], 0
          %s452 = smul.addr %s24, 2
          %s453 = scalar_lea.hbm %s4, %s452
          %s455 = sshll.u32 [#allocation9], 4
          %s456 = int_to_ptr.vmem [resolvable:$true] %s455
          %s457 = sshll.u32 %s453, 4
          %s458 = int_to_ptr.hbm [resolvable:$true] %s457
          %460 = dma.vmem_to_hbm [thread:$0]  %s456, 32, %s458, [#allocation5]
        $region60: #{tpu_custom_call.1} parent=35 // pred_fallthru
          _
        // Predicated region
        $region61: #{tpu_custom_call.1} parent=35 // pred_check
          %p461 = pneg %p141
        $region62: #{tpu_custom_call.1} parent=35 // pred_check_branch
          %463 = sbr.rel (%p461) target = $region64
        $region63: #{tpu_custom_call.1} parent=35 // pred_region
          %465 = dma.done [#allocation5], 32
        $region64: #{tpu_custom_call.1} parent=35 // pred_fallthru
          _
      $region36: #{tpu_custom_call.1} parent=5 // pred_fallthru
        _
      %p466 = scmp.le.s32.totalorder 2, %s15
      // Predicated region
      $region65: #{tpu_custom_call.1} parent=5 // pred_check
        %p467 = pneg %p466
      $region66: #{tpu_custom_call.1} parent=5 // pred_check_branch
        %469 = sbr.rel (%p467) target = $region68
      $region67: #{tpu_custom_call.1} parent=5 // pred_region
        %s470 = ssub.s32 %s15, 2
      $region68: #{tpu_custom_call.1} parent=5 // pred_fallthru
        _
    $region6: #{tpu_custom_call.1} parent=1 // loop_footer
      %s19 = sadd.s32 1, %s15
    $region7: #{tpu_custom_call.1} parent=1 // loop_footer_branch
      %14 = sbr.rel target = $region3
    $region8: #{tpu_custom_call.1} parent=1 // loop_exit
      _
    %471 = vsyncpa [#allocation4], 1
    %s472 = scalar_lea.sflag [#allocation4], 1
    %473 = vsyncpa %s472, 1
    %474 = vsyncpa [#allocation7], 1
    %475 = vsyncpa [#allocation5], 1
    %s476 = scalar_lea.sflag [#allocation5], 1
    %477 = vsyncpa %s476, 1

</llo_original>
